<compile_context>
chip_gen: v5e
topology: v5e:2x2
jax: 0.10.0
libtpu: 0.0.40
codegen_flags: <defaults>
</compile_context>

<pallas_src>
import functools

import jax
import jax.numpy as jnp
from jax.experimental import pallas as pl
from jax.experimental.pallas import tpu as pltpu


# ----------------------------------------------------------------------------
# VMEM budget / tiling helpers
# ----------------------------------------------------------------------------
def _vmem_limit_bytes():
    """Chip-aware scoped-VMEM budget (~3/4 of physical, capped at 100 MiB)."""
    cap = 128 * 1024 * 1024
    try:
        info = pltpu.get_tpu_info()
        for name in ("vmem_capacity_bytes", "vmem_size_bytes", "vmem_bytes"):
            v = getattr(info, name, None)
            if v:
                cap = int(v)
                break
    except Exception:
        pass
    return min(100 * 1024 * 1024, (cap * 3) // 4)


def _pick_tile_h(H, W, cin, inner, maxd, budget):
    """Largest row-tile (divisor of H, >= maxd unless == H) whose per-step
    working set (double-buffered halo input + output block + weights) fits."""
    Wp = W + 2 * maxd
    cout = 5 * inner

    def vmem_use(th):
        aspp_in = 2 * (th + 2 * maxd) * Wp * cin * 2      # halo scratch, 2 slots, bf16
        aspp_out = 2 * th * W * cout * 2                  # output block, double-buffered
        aspp_w = 28 * cin * inner * 2 + 12 * inner * 4
        head_in = 2 * (th + 2) * (W + 2) * cout * 2
        head_out = 2 * th * W * 128 * 2
        head_w = 9 * cout * 256 * 2 + 256 * 128 * 2
        return max(aspp_in + aspp_out + aspp_w, head_in + head_out + head_w)

    cands = sorted({d for d in range(1, H + 1) if H % d == 0 and d >= maxd} | {H},
                   reverse=True)
    for th in cands:
        if vmem_use(th) <= budget:
            return th
    return cands[-1]


# ----------------------------------------------------------------------------
# Shared halo-DMA helper (top / centre / bottom pieces of one row-tile)
# ----------------------------------------------------------------------------
def _halo_copies(src_hbm, buf, sem, b, t_idx, slot, tile_h, halo, W):
    """Async-copy descriptors moving rows of image `b`, row-tile `t_idx`
    (tile_h rows plus `halo` rows above/below) into buf[slot]'s centre
    columns.  The same descriptors are rebuilt for the matching .wait()."""
    top = pltpu.make_async_copy(
        src_hbm.at[b, pl.ds(t_idx * tile_h - halo, halo)],
        buf.at[slot, pl.ds(0, halo), pl.ds(halo, W)],
        sem.at[slot, 0])
    mid = pltpu.make_async_copy(
        src_hbm.at[b, pl.ds(t_idx * tile_h, tile_h)],
        buf.at[slot, pl.ds(halo, tile_h), pl.ds(halo, W)],
        sem.at[slot, 1])
    bot = pltpu.make_async_copy(
        src_hbm.at[b, pl.ds((t_idx + 1) * tile_h, halo)],
        buf.at[slot, pl.ds(halo + tile_h, halo), pl.ds(halo, W)],
        sem.at[slot, 2])
    return top, mid, bot


# ----------------------------------------------------------------------------
# Kernels
# ----------------------------------------------------------------------------
def _gap_kernel(x_ref, w_ref, sb_ref, o_ref, *, inv_hw):
    """Global average pool (one full image block per batch) + 1x1 conv + BN + ReLU."""
    x = x_ref[0].astype(jnp.float32)                     # (H, W, Cin)
    cin = x.shape[-1]
    m = jnp.sum(x.reshape(-1, cin), axis=0, keepdims=True) * inv_hw   # (1, Cin)
    y = jnp.dot(m, w_ref[...], preferred_element_type=jnp.float32)    # (1, inner)
    o_ref[0] = jnp.maximum(y * sb_ref[0:1, :] + sb_ref[1:2, :], 0.0)


def _aspp_fused_kernel(x_hbm, gap_ref, w2_ref, sb2_ref, w345_ref, sb345_ref,
                       o_ref, xbuf, sem, *, tile_h, W, maxd, dilations, inner,
                       n_h):
    """Fused ASPP branches: pooled-branch broadcast + 1x1 conv + three dilated
    3x3 convs, computed from a double-buffered, manually DMA'd halo block of
    the (unpadded) input; each branch is stored into its channel slice."""
    b = pl.program_id(0)
    t = pl.program_id(1)
    slot = t % 2
    halo_h = tile_h + 2 * maxd
    Wp = W + 2 * maxd
    cin = xbuf.shape[-1]
    last_slot = (n_h - 1) % 2
    hw = tile_h * W

    # ---- prime: first row-tile of this batch — zero fixed pads, fetch tile 0.
    @pl.when(t == 0)
    def _prime():
        # Column pad strips are never touched by any DMA: zero both slots.
        zcol = jnp.zeros((halo_h, maxd, cin), xbuf.dtype)
        for s in (0, 1):
            xbuf[s, :, 0:maxd, :] = zcol
            xbuf[s, :, maxd + W:Wp, :] = zcol
        # Top halo rows of tile 0 fall outside the image.
        xbuf[0, 0:maxd, :, :] = jnp.zeros((maxd, Wp, cin), xbuf.dtype)
        if n_h == 1:
            xbuf[0, maxd + tile_h:halo_h, :, :] = jnp.zeros(
                (maxd, Wp, cin), xbuf.dtype)
        top, mid, bot = _halo_copies(x_hbm, xbuf, sem, b, t, 0, tile_h, maxd, W)
        mid.start()
        if n_h > 1:
            bot.start()

    # ---- prefetch the next row-tile into the other slot (overlaps compute).
    if n_h > 1:
        @pl.when(t + 1 < n_h)
        def _prefetch():
            nslot = (t + 1) % 2

            @pl.when(t + 1 == n_h - 1)
            def _zero_bottom():
                xbuf[last_slot, maxd + tile_h:halo_h, :, :] = jnp.zeros(
                    (maxd, Wp, cin), xbuf.dtype)

            top, mid, bot = _halo_copies(x_hbm, xbuf, sem, b, t + 1, nslot,
                                         tile_h, maxd, W)
            top.start()
            mid.start()

            @pl.when(t + 1 < n_h - 1)
            def _start_bottom():
                bot.start()

    # ---- branch 1 does not need x: store it before waiting on the DMA.
    f1 = jnp.broadcast_to(gap_ref[0], (hw, inner))       # pooled + upsample==broadcast
    o_ref[0, :, :, 0:inner] = f1.reshape(tile_h, W, inner).astype(o_ref.dtype)

    # ---- wait for this tile's halo block (started at prime / previous step).
    topw, midw, botw = _halo_copies(x_hbm, xbuf, sem, b, t, slot, tile_h, maxd, W)

    @pl.when(t > 0)
    def _wait_top():
        topw.wait()

    midw.wait()

    @pl.when(t < n_h - 1)
    def _wait_bot():
        botw.wait()

    # ---- branch 2: 1x1 conv + BN + ReLU on the centre region.
    xc = xbuf[slot, maxd:maxd + tile_h, maxd:maxd + W, :].reshape(hw, cin)
    y2 = jnp.dot(xc, w2_ref[...], preferred_element_type=jnp.float32)
    f2 = jnp.maximum(y2 * sb2_ref[0:1, :] + sb2_ref[1:2, :], 0.0)
    o_ref[0, :, :, inner:2 * inner] = f2.reshape(tile_h, W, inner).astype(o_ref.dtype)

    # ---- branches 3..5: dilated 3x3 convs as 9 per-tap MXU contractions
    # accumulated in f32 (no (hw, 9*Cin) concat temporary).  At production
    # Cin >= 128 each tap already saturates the MXU; for tiny Cin a single
    # K=9*Cin contraction would be denser but is irrelevant at demo scale.
    for j, d in enumerate(dilations):
        acc = jnp.zeros((hw, inner), jnp.float32)
        for ky in range(3):
            oy = maxd + (ky - 1) * d
            for kx in range(3):
                ox = maxd + (kx - 1) * d
                if ky == 1 and kx == 1:
                    tap = xc                                   # centre tap == branch-2 lhs
                else:
                    tap = xbuf[slot, oy:oy + tile_h, ox:ox + W, :].reshape(hw, cin)
                acc = acc + jnp.dot(tap, w345_ref[j, 3 * ky + kx],
                                    preferred_element_type=jnp.float32)
        f = jnp.maximum(acc * sb345_ref[j, 0:1, :] + sb345_ref[j, 1:2, :], 0.0)
        c0 = (2 + j) * inner
        o_ref[0, :, :, c0:c0 + inner] = f.reshape(tile_h, W, inner).astype(o_ref.dtype)


def _head_fused_kernel(a_hbm, w0_ref, sb0_ref, w1_ref, b1_ref, o_ref,
                       abuf, sem, *, tile_h, W, n_h):
    """Fused head: 3x3 conv (pad=1) + BN + ReLU + 1x1 conv + bias.
    The 256-channel intermediate stays in VMEM; logits stored lane-dense bf16."""
    b = pl.program_id(0)
    t = pl.program_id(1)
    slot = t % 2
    halo = 1
    halo_h = tile_h + 2
    Wp = W + 2
    ca = abuf.shape[-1]
    cmid = w0_ref.shape[-1]
    last_slot = (n_h - 1) % 2

    @pl.when(t == 0)
    def _prime():
        zcol = jnp.zeros((halo_h, 1, ca), abuf.dtype)
        for s in (0, 1):
            abuf[s, :, 0:1, :] = zcol
            abuf[s, :, W + 1:Wp, :] = zcol
        abuf[0, 0:1, :, :] = jnp.zeros((1, Wp, ca), abuf.dtype)
        if n_h == 1:
            abuf[0, tile_h + 1:halo_h, :, :] = jnp.zeros((1, Wp, ca), abuf.dtype)
        top, mid, bot = _halo_copies(a_hbm, abuf, sem, b, t, 0, tile_h, halo, W)
        mid.start()
        if n_h > 1:
            bot.start()

    if n_h > 1:
        @pl.when(t + 1 < n_h)
        def _prefetch():
            nslot = (t + 1) % 2

            @pl.when(t + 1 == n_h - 1)
            def _zero_bottom():
                abuf[last_slot, tile_h + 1:halo_h, :, :] = jnp.zeros(
                    (1, Wp, ca), abuf.dtype)

            top, mid, bot = _halo_copies(a_hbm, abuf, sem, b, t + 1, nslot,
                                         tile_h, halo, W)
            top.start()
            mid.start()

            @pl.when(t + 1 < n_h - 1)
            def _start_bottom():
                bot.start()

    topw, midw, botw = _halo_copies(a_hbm, abuf, sem, b, t, slot, tile_h, halo, W)

    @pl.when(t > 0)
    def _wait_top():
        topw.wait()

    midw.wait()

    @pl.when(t < n_h - 1)
    def _wait_bot():
        botw.wait()

    hw = tile_h * W
    acc = jnp.zeros((hw, cmid), jnp.float32)
    for ky in range(3):
        for kx in range(3):
            tap = abuf[slot, ky:ky + tile_h, kx:kx + W, :].reshape(hw, ca)
            acc = acc + jnp.dot(tap, w0_ref[3 * ky + kx],
                                preferred_element_type=jnp.float32)
    h = jnp.maximum(acc * sb0_ref[0:1, :] + sb0_ref[1:2, :], 0.0)
    # TODO(synk): nn.Dropout2d(0.1) is identity at inference; training-mode
    # channel dropout is not implemented.
    logits = jnp.dot(h.astype(w1_ref.dtype), w1_ref[...],
                     preferred_element_type=jnp.float32) + b1_ref[...]
    o_ref[0] = logits.reshape(tile_h, W, -1).astype(o_ref.dtype)


# ----------------------------------------------------------------------------
# pallas_call wrappers
# ----------------------------------------------------------------------------
def gap_conv1x1(x_nhwc, w, sb, *, vmem_limit):
    B, H, W, Cin = x_nhwc.shape
    inner = w.shape[1]
    kernel = functools.partial(_gap_kernel, inv_hw=1.0 / float(H * W))
    return pl.pallas_call(
        kernel,
        out_shape=jax.ShapeDtypeStruct((B, 1, inner), jnp.float32),
        grid=(B,),
        in_specs=[
            pl.BlockSpec((1, H, W, Cin), lambda b: (b, 0, 0, 0)),
            pl.BlockSpec((Cin, inner), lambda b: (0, 0)),
            pl.BlockSpec((2, inner), lambda b: (0, 0)),
        ],
        out_specs=pl.BlockSpec((1, 1, inner), lambda b: (b, 0, 0)),
        compiler_params=pltpu.CompilerParams(
            dimension_semantics=("parallel",),
            vmem_limit_bytes=vmem_limit),
    )(x_nhwc, w, sb)


def aspp_fused(x, gap, w2, sb2, w345, sb345, *, tile_h, maxd, dilations, inner,
               vmem_limit):
    B, H, W, Cin = x.shape
    n_h = H // tile_h
    cout = 5 * inner
    halo_h = tile_h + 2 * maxd
    Wp = W + 2 * maxd
    kernel = functools.partial(
        _aspp_fused_kernel, tile_h=tile_h, W=W, maxd=maxd,
        dilations=tuple(int(d) for d in dilations), inner=inner, n_h=n_h)
    # Grid: batch (parallel) x row-tile (arbitrary -> sequential per core so the
    # manual double-buffered halo prefetch stays correct under megacore).
    # TODO(synk): at B=1 on v7x one core idles; a per-core row split would need
    # a core-aware prime.  TODO(synk): at Cin=2048 on v7x add a Cin-chunk axis.
    return pl.pallas_call(
        kernel,
        out_shape=jax.ShapeDtypeStruct((B, H, W, cout), jnp.bfloat16),
        grid=(B, n_h),
        in_specs=[
            pl.BlockSpec(memory_space=pl.ANY),                            # x (HBM, unpadded)
            pl.BlockSpec((1, 1, inner), lambda b, t: (b, 0, 0)),          # pooled branch
            pl.BlockSpec((Cin, inner), lambda b, t: (0, 0)),              # 1x1 weight
            pl.BlockSpec((2, inner), lambda b, t: (0, 0)),                # 1x1 scale/bias
            pl.BlockSpec((3, 9, Cin, inner), lambda b, t: (0, 0, 0, 0)),  # 3x3 weights (per tap)
            pl.BlockSpec((3, 2, inner), lambda b, t: (0, 0, 0)),          # 3x3 scale/bias
        ],
        out_specs=pl.BlockSpec((1, tile_h, W, cout), lambda b, t: (b, t, 0, 0)),
        scratch_shapes=[
            pltpu.VMEM((2, halo_h, Wp, Cin), jnp.bfloat16),   # double-buffered halo
            pltpu.SemaphoreType.DMA((2, 3)),                  # (slot, top/mid/bot)
        ],
        compiler_params=pltpu.CompilerParams(
            dimension_semantics=("parallel", "arbitrary"),
            vmem_limit_bytes=vmem_limit),
    )(x, gap, w2, sb2, w345, sb345)


def head_fused(a, w0, sb0, w1, b1, *, tile_h, ncp, vmem_limit):
    B, H, W, Ca = a.shape
    n_h = H // tile_h
    cmid = w0.shape[-1]
    kernel = functools.partial(_head_fused_kernel, tile_h=tile_h, W=W, n_h=n_h)
    return pl.pallas_call(
        kernel,
        out_shape=jax.ShapeDtypeStruct((B, H, W, ncp), jnp.bfloat16),
        grid=(B, n_h),
        in_specs=[
            pl.BlockSpec(memory_space=pl.ANY),                          # aspp out (HBM, unpadded)
            pl.BlockSpec((9, Ca, cmid), lambda b, t: (0, 0, 0)),
            pl.BlockSpec((2, cmid), lambda b, t: (0, 0)),
            pl.BlockSpec((cmid, ncp), lambda b, t: (0, 0)),
            pl.BlockSpec((1, ncp), lambda b, t: (0, 0)),
        ],
        out_specs=pl.BlockSpec((1, tile_h, W, ncp), lambda b, t: (b, t, 0, 0)),
        scratch_shapes=[
            pltpu.VMEM((2, tile_h + 2, W + 2, Ca), jnp.bfloat16),
            pltpu.SemaphoreType.DMA((2, 3)),
        ],
        compiler_params=pltpu.CompilerParams(
            dimension_semantics=("parallel", "arbitrary"),
            vmem_limit_bytes=vmem_limit),
    )(a, w0, sb0, w1, b1)


# ----------------------------------------------------------------------------
# Parameters (deterministic synthetic init; BN folded to scale/bias, eval mode)
# ----------------------------------------------------------------------------
def init_params(key, in_planes, inner, num_classes):
    eps = 1e-5
    ks = iter(jax.random.split(key, 40))

    def w1x1(cin, cout):
        return 0.1 * jax.random.normal(next(ks), (cin, cout), jnp.float32)

    def w3x3(cin, cout):
        return 0.1 * jax.random.normal(next(ks), (3, 3, cin, cout), jnp.float32)

    def bn(c):
        gamma = 1.0 + 0.1 * jax.random.normal(next(ks), (c,), jnp.float32)
        beta = 0.1 * jax.random.normal(next(ks), (c,), jnp.float32)
        mean = 0.1 * jax.random.normal(next(ks), (c,), jnp.float32)
        var = 1.0 + 0.1 * jnp.abs(jax.random.normal(next(ks), (c,), jnp.float32))
        s = gamma / jnp.sqrt(var + eps)
        b = beta - mean * s
        return s.reshape(1, c), b.reshape(1, c)

    p = {}
    p["a1_w"] = w1x1(in_planes, inner); p["a1_s"], p["a1_b"] = bn(inner)
    p["a2_w"] = w1x1(in_planes, inner); p["a2_s"], p["a2_b"] = bn(inner)
    p["a3_w"] = w3x3(in_planes, inner); p["a3_s"], p["a3_b"] = bn(inner)
    p["a4_w"] = w3x3(in_planes, inner); p["a4_s"], p["a4_b"] = bn(inner)
    p["a5_w"] = w3x3(in_planes, inner); p["a5_s"], p["a5_b"] = bn(inner)
    aspp_out_planes = 5 * inner                      # ASPP.get_outplanes()
    p["h0_w"] = w3x3(aspp_out_planes, 256); p["h0_s"], p["h0_b"] = bn(256)
    p["h1_w"] = w1x1(256, num_classes)
    p["h1_bias"] = 0.1 * jax.random.normal(next(ks), (num_classes,), jnp.float32)
    return p


def pack_params(p, num_classes):
    """Kernel-side packing: bf16 matmul weights, stacked BN scale/bias,
    per-tap 3x3 weights as (..., 9, Cin, Cout), logits weights padded to 128."""
    bf = jnp.bfloat16
    cin = p["a2_w"].shape[0]
    inner = p["a2_w"].shape[1]
    ca = p["h0_w"].shape[2]
    cmid = p["h0_w"].shape[3]
    ncp = ((num_classes + 127) // 128) * 128

    q = {}
    q["a1_w"] = p["a1_w"]                                          # f32 (tiny GAP matmul)
    q["a1_sb"] = jnp.concatenate([p["a1_s"], p["a1_b"]], axis=0)
    q["a2_w"] = p["a2_w"].astype(bf)
    q["a2_sb"] = jnp.concatenate([p["a2_s"], p["a2_b"]], axis=0)
    q["w345"] = jnp.stack([p["a3_w"].reshape(9, cin, inner),
                           p["a4_w"].reshape(9, cin, inner),
                           p["a5_w"].reshape(9, cin, inner)], axis=0).astype(bf)
    q["sb345"] = jnp.stack([
        jnp.concatenate([p["a3_s"], p["a3_b"]], axis=0),
        jnp.concatenate([p["a4_s"], p["a4_b"]], axis=0),
        jnp.concatenate([p["a5_s"], p["a5_b"]], axis=0)], axis=0)
    q["h0_w"] = p["h0_w"].reshape(9, ca, cmid).astype(bf)
    q["h0_sb"] = jnp.concatenate([p["h0_s"], p["h0_b"]], axis=0)
    q["h1_w"] = jnp.zeros((cmid, ncp), jnp.float32).at[:, :num_classes].set(
        p["h1_w"]).astype(bf)
    q["h1_b"] = jnp.zeros((1, ncp), jnp.float32).at[0, :num_classes].set(
        p["h1_bias"])
    return q, ncp


# ----------------------------------------------------------------------------
# Forward pass (matches dec_deeplabv3.forward, inference mode)
# ----------------------------------------------------------------------------
def dec_deeplabv3_forward(x_nchw, p, dilations, tile_h=None):
    nc = p["h1_w"].shape[1]
    inner = p["a2_w"].shape[1]
    x = jnp.transpose(x_nchw, (0, 2, 3, 1)).astype(jnp.bfloat16)   # NCHW -> NHWC bf16
    B, H, W, Cin = x.shape
    maxd = max(int(d) for d in dilations)
    q, ncp = pack_params(p, nc)
    vlim = _vmem_limit_bytes()

    if tile_h is None:
        tile_h = _pick_tile_h(H, W, Cin, inner, maxd, vlim)
    n_h = H // tile_h
    assert H % tile_h == 0, "tile_h must divide H"
    assert n_h == 1 or tile_h >= maxd, (
        "row tile must cover the dilation halo (tile_h >= max(dilations)) so "
        "boundary halos come from at most one neighbouring tile")

    # --- ASPP branch 1: global average pool + 1x1 conv + BN + ReLU ---
    gap = gap_conv1x1(x, q["a1_w"], q["a1_sb"], vmem_limit=vlim)       # (B,1,inner) f32

    # --- fused ASPP branches 2..5 + broadcast of branch 1 + channel concat ---
    aspp = aspp_fused(x, gap, q["a2_w"], q["a2_sb"], q["w345"], q["sb345"],
                      tile_h=tile_h, maxd=maxd, dilations=dilations,
                      inner=inner, vmem_limit=vlim)                    # (B,H,W,5*inner) bf16

    # --- fused head: 3x3 conv + BN + ReLU (+Dropout2d identity) + 1x1 + bias ---
    logits_p = head_fused(aspp, q["h0_w"], q["h0_sb"], q["h1_w"], q["h1_b"],
                          tile_h=tile_h, ncp=ncp, vmem_limit=vlim)     # (B,H,W,ncp) bf16
    logits = logits_p[..., :nc].astype(jnp.float32)
    return jnp.transpose(logits, (0, 3, 1, 2))                         # back to NCHW


# ----------------------------------------------------------------------------
# Pure-JAX reference (for validation)
# ----------------------------------------------------------------------------
def reference_forward(x_nchw, p, dilations):
    x = jnp.transpose(x_nchw, (0, 2, 3, 1)).astype(jnp.float32)
    B, H, W, Cin = x.shape

    def conv(xin, w_hwio, dil, pad):
        return jax.lax.conv_general_dilated(
            xin, w_hwio, window_strides=(1, 1),
            padding=((pad, pad), (pad, pad)),
            rhs_dilation=(dil, dil),
            dimension_numbers=("NHWC", "HWIO", "NHWC"))

    def affine(y, s, b, relu=True):
        y = y * s.reshape(1, 1, 1, -1) + b.reshape(1, 1, 1, -1)
        return jnp.maximum(y, 0.0) if relu else y

    inner = p["a1_w"].shape[1]
    gm = jnp.mean(x, axis=(1, 2), keepdims=True)
    f1 = affine(conv(gm, p["a1_w"].reshape(1, 1, Cin, inner), 1, 0), p["a1_s"], p["a1_b"])
    f1 = jnp.broadcast_to(f1, (B, H, W, inner))
    f2 = affine(conv(x, p["a2_w"].reshape(1, 1, Cin, inner), 1, 0), p["a2_s"], p["a2_b"])
    f3 = affine(conv(x, p["a3_w"], dilations[0], dilations[0]), p["a3_s"], p["a3_b"])
    f4 = affine(conv(x, p["a4_w"], dilations[1], dilations[1]), p["a4_s"], p["a4_b"])
    f5 = affine(conv(x, p["a5_w"], dilations[2], dilations[2]), p["a5_s"], p["a5_b"])
    aspp_out = jnp.concatenate([f1, f2, f3, f4, f5], axis=-1)
    h = affine(conv(aspp_out, p["h0_w"], 1, 1), p["h0_s"], p["h0_b"])
    nc = p["h1_w"].shape[1]
    logits = conv(h, p["h1_w"].reshape(1, 1, 256, nc), 1, 0) + p["h1_bias"].reshape(1, 1, 1, nc)
    return jnp.transpose(logits, (0, 3, 1, 2))


# ----------------------------------------------------------------------------
if __name__ == "__main__":
    B, in_planes, H, W = 2, 8, 16, 16
    inner_planes, num_classes = 32, 8
    dilations = (2, 4, 6)   # scaled-down (12, 24, 36) for the 16x16 demo

    key = jax.random.PRNGKey(0)
    pkey, xkey = jax.random.split(key)
    params = init_params(pkey, in_planes, inner_planes, num_classes)
    x = jax.random.normal(xkey, (B, in_planes, H, W), jnp.float32)

    # tile_h=8 -> two row-tiles per image: exercises the boundary zero-fill,
    # the interior halo DMA and the double-buffered prefetch paths.
    out = dec_deeplabv3_forward(x, params, dilations, tile_h=8)
    out = jax.block_until_ready(out)
    assert out.shape == (B, num_classes, H, W), out.shape

    ref = jax.block_until_ready(reference_forward(x, params, dilations))
    rel_err = float(jnp.linalg.norm(out.astype(jnp.float32) - ref)
                    / (jnp.linalg.norm(ref) + 1e-8))
    assert rel_err < 5e-2, f"kernel/reference mismatch, rel_err={rel_err}"

    print("KERNEL_OK")
</pallas_src>

<mosaic_0001>
module attributes {stable_mosaic.version = 11 : i64} {
  func.func @_gap_kernel(%arg0: i32, %arg1: memref<1x16x16x8xbf16, #tpu.memory_space<vmem>>, %arg2: memref<8x32xf32, #tpu.memory_space<vmem>>, %arg3: memref<2x32xf32, #tpu.memory_space<vmem>>, %arg4: memref<1x1x32xf32, #tpu.memory_space<vmem>>) attributes {dimension_semantics = [#tpu.dimension_semantics<parallel>], iteration_bounds = array<i64: 2>, scalar_prefetch = 0 : i64, scratch_operands = 0 : i64, tpu.core_type = #tpu.core_type<tc>, window_params = [{transform_indices = @transform_0, window_bounds = array<i64: 1, 16, 16, 8>}, {pipeline_mode = #tpu.pipeline_mode<synchronous>, transform_indices = @transform_1, window_bounds = array<i64: 8, 32>}, {pipeline_mode = #tpu.pipeline_mode<synchronous>, transform_indices = @transform_2, window_bounds = array<i64: 2, 32>}, {transform_indices = @transform_3, window_bounds = array<i64: 1, 1, 32>}]} {
    %c0 = arith.constant 0 : index
    %c0_0 = arith.constant 0 : index
    %c0_1 = arith.constant 0 : index
    %c0_2 = arith.constant 0 : index
    %0 = vector.load %arg1[%c0, %c0_0, %c0_1, %c0_2] : memref<1x16x16x8xbf16, #tpu.memory_space<vmem>>, vector<1x16x16x8xbf16>
    %1 = vector.shape_cast %0 : vector<1x16x16x8xbf16> to vector<16x16x8xbf16>
    %2 = arith.extf %1 : vector<16x16x8xbf16> to vector<16x16x8xf32>
    %3 = vector.shape_cast %2 : vector<16x16x8xf32> to vector<256x8xf32>
    %cst = arith.constant dense<0.000000e+00> : vector<8xf32>
    %4 = vector.multi_reduction <add>, %3, %cst [0] : vector<256x8xf32> to vector<8xf32>
    %5 = vector.shape_cast %4 : vector<8xf32> to vector<1x8xf32>
    %cst_3 = arith.constant 3.906250e-03 : f32
    %6 = vector.broadcast %cst_3 : f32 to vector<1x8xf32>
    %7 = arith.mulf %5, %6 : vector<1x8xf32>
    %c0_4 = arith.constant 0 : index
    %c0_5 = arith.constant 0 : index
    %8 = vector.load %arg2[%c0_4, %c0_5] : memref<8x32xf32, #tpu.memory_space<vmem>>, vector<8x32xf32>
    %cst_6 = arith.constant dense<0.000000e+00> : vector<1x32xf32>
    %9 = tpu.matmul %7, %8, %cst_6 {dimension_numbers = #tpu.dot_dimension_numbers<[1], [0], [0], [1], [0, 0, 1, 1], [], []>} : vector<1x8xf32>, vector<8x32xf32>, vector<1x32xf32> -> vector<1x32xf32>
    %c0_7 = arith.constant 0 : index
    %c0_8 = arith.constant 0 : index
    %10 = vector.load %arg3[%c0_7, %c0_8] : memref<2x32xf32, #tpu.memory_space<vmem>>, vector<1x32xf32>
    %11 = arith.mulf %9, %10 : vector<1x32xf32>
    %c1 = arith.constant 1 : index
    %c0_9 = arith.constant 0 : index
    %12 = vector.load %arg3[%c1, %c0_9] : memref<2x32xf32, #tpu.memory_space<vmem>>, vector<1x32xf32>
    %13 = arith.addf %11, %12 : vector<1x32xf32>
    %cst_10 = arith.constant 0.000000e+00 : f32
    %14 = vector.broadcast %cst_10 : f32 to vector<1x32xf32>
    %15 = arith.maximumf %13, %14 : vector<1x32xf32>
    %c0_11 = arith.constant 0 : index
    %c0_12 = arith.constant 0 : index
    %c0_13 = arith.constant 0 : index
    %16 = vector.load %arg4[%c0_11, %c0_12, %c0_13] : memref<1x1x32xf32, #tpu.memory_space<vmem>>, vector<1x1x32xf32>
    %17 = vector.shape_cast %16 : vector<1x1x32xf32> to vector<1x32xf32>
    %18 = vector.shape_cast %15 : vector<1x32xf32> to vector<1x1x32xf32>
    tpu.vector_store %arg4[%c0_11, %c0_12, %c0_13], %18 {strides = array<i32>} : memref<1x1x32xf32, #tpu.memory_space<vmem>>, vector<1x1x32xf32>,
    return
  }
  func.func @transform_0(%arg0: i32) -> (i32, i32, i32, i32) {
    %c0_i32 = arith.constant 0 : i32
    %c0_i32_0 = arith.constant 0 : i32
    %c0_i32_1 = arith.constant 0 : i32
    %c0_i32_2 = arith.constant 0 : i32
    return %arg0, %c0_i32, %c0_i32_0, %c0_i32_1 : i32, i32, i32, i32
  }
  func.func @transform_1(%arg0: i32) -> (i32, i32) {
    %c0_i32 = arith.constant 0 : i32
    %c0_i32_0 = arith.constant 0 : i32
    %c0_i32_1 = arith.constant 0 : i32
    return %c0_i32, %c0_i32_0 : i32, i32
  }
  func.func @transform_2(%arg0: i32) -> (i32, i32) {
    %c0_i32 = arith.constant 0 : i32
    %c0_i32_0 = arith.constant 0 : i32
    %c0_i32_1 = arith.constant 0 : i32
    return %c0_i32, %c0_i32_0 : i32, i32
  }
  func.func @transform_3(%arg0: i32) -> (i32, i32, i32) {
    %c0_i32 = arith.constant 0 : i32
    %c0_i32_0 = arith.constant 0 : i32
    %c0_i32_1 = arith.constant 0 : i32
    return %arg0, %c0_i32, %c0_i32_0 : i32, i32, i32
  }
}

</mosaic_0001>

<llo_original>
// kernel: tpu_custom_call.1
$region0: #{tpu_custom_call.1}
  #allocation0 [shape = 'u32[]', space=smem, size = 0x4, offset = 0x4, fixed_abs, tag = 'smem constant byte address 0x4 - core index']
  #allocation1 [shape = 'u32[72,128]{1,0:T(1,128)}', space=vmem, size = 0x9000, scoped, tag = 'internal scratch']
  %s0 = inlined_call_operand.vmem [shape: bf16[2,16,16,8], index: 0, kind: input, shape index: {}]
  %s1 = inlined_call_operand.vmem [shape: f32[8,32], index: 1, kind: input, shape index: {}]
  %s2 = inlined_call_operand.vmem [shape: f32[2,32], index: 2, kind: input, shape index: {}]
  %s3 = inlined_call_operand.hbm [shape: f32[2,1,32], index: 3, kind: output, shape index: {}]
  %s4 = sld [smem:[#allocation0]]
  $region45: #{tpu_custom_call.1} parent=0
    _
  %s6 = ssub.s32 1, %s4
  %s7 = scalar_select 0, %s6, %s4
  $region1: #{tpu_custom_call.1} parent=0
    #allocation2 [shape = 'u8[1024]{0}', space=vmem, size = 0x400, scoped, tag = 'output window, operand 0']
    #allocation3 [shape = 's32[2]{0}', space=sflag, size = 0x8, scoped, tag = 'scoped memory for tpu_custom_call.1']
    %8 = vsyncpa [#allocation3], 0
    %s9 = scalar_lea.sflag [#allocation3], 1
    %10 = vsyncpa %s9, 0
    loop: start=0, step=1, limit=4
    $region2: #{tpu_custom_call.1} parent=1 // loop_pre_header
      _
    $region3: #{tpu_custom_call.1} parent=1 // loop_header
      %s12 = sphi 0, %s16
      %p13 = scmp.ge.s32.totalorder %s12, 4
      %s22 = sphi 0, %s24
      %s25 = sphi 0, %s22
      %s26 = sphi 0, %s25
      %s42 = sphi 0, %s26
      %s46 = sphi 0, %s46
      %s48 = sphi 0, %s46
      %s49 = sphi 0, %s48
      %s63 = sphi 0, %s49
      %s67 = sphi 0, %s67
      %s69 = sphi 0, %s67
      %s70 = sphi 0, %s69
      %s84 = sphi 0, %s70
      %s90 = sphi 0, %s92
      %s93 = sphi 0, %s90
      %s94 = sphi 0, %s93
      %s110 = sphi 0, %s94
    $region4: #{tpu_custom_call.1} parent=1 // loop_header_branch
      %15 = sbr.rel (%p13) target = $region8
    $region5: #{tpu_custom_call.1} parent=1 // loop_body
      %s17 = ssub.s32 %s12, 1
      %s18 = ssub.s32 %s12, 2
      %s19 = sadd.s32 %s12, 1
      %s20 = ssub.s32 %s12, %s19
      %p21 = scmp.eq.s32.totalorder %s20, 0
      %s23 = sadd.s32 %s22, 1
      %s24 = scalar_select %p21, %s22, %s23
      %p27 = pneg %p21
      %p28 = scmp.eq.s32.totalorder %s12, 1
      %p29 = por %p27, %p28
      %p30 = scmp.ne.s32.totalorder %s22, %s25
      %p31 = scmp.eq.s32.totalorder %s12, 0
      %p32 = por %p30, %p31
      %p33 = scmp.ne.s32.totalorder %s22, %s25
      %p34 = scmp.eq.s32.totalorder %s17, 1
      %p35 = por %p33, %p34
      %p36 = scmp.ne.s32.totalorder %s25, %s26
      %p37 = scmp.eq.s32.totalorder %s17, 0
      %p38 = por %p36, %p37
      %p39 = scmp.ne.s32.totalorder %s25, %s26
      %p40 = scmp.eq.s32.totalorder %s18, 1
      %p41 = por %p39, %p40
      %p43 = scmp.ne.s32.totalorder %s26, %s42
      %p44 = scmp.eq.s32.totalorder %s18, 0
      %p45 = por %p43, %p44
      %s47 = sadd.s32 %s46, 1
      %p50 = scmp.eq.s32.totalorder %s12, 1
      %p51 = scmp.ne.s32.totalorder %s46, %s48
      %p52 = scmp.eq.s32.totalorder %s12, 0
      %p53 = por %p51, %p52
      %p54 = scmp.ne.s32.totalorder %s46, %s48
      %p55 = scmp.eq.s32.totalorder %s17, 1
      %p56 = por %p54, %p55
      %p57 = scmp.ne.s32.totalorder %s48, %s49
      %p58 = scmp.eq.s32.totalorder %s17, 0
      %p59 = por %p57, %p58
      %p60 = scmp.ne.s32.totalorder %s48, %s49
      %p61 = scmp.eq.s32.totalorder %s18, 1
      %p62 = por %p60, %p61
      %p64 = scmp.ne.s32.totalorder %s49, %s63
      %p65 = scmp.eq.s32.totalorder %s18, 0
      %p66 = por %p64, %p65
      %s68 = sadd.s32 %s67, 1
      %p71 = scmp.eq.s32.totalorder %s12, 1
      %p72 = scmp.ne.s32.totalorder %s67, %s69
      %p73 = scmp.eq.s32.totalorder %s12, 0
      %p74 = por %p72, %p73
      %p75 = scmp.ne.s32.totalorder %s67, %s69
      %p76 = scmp.eq.s32.totalorder %s17, 1
      %p77 = por %p75, %p76
      %p78 = scmp.ne.s32.totalorder %s69, %s70
      %p79 = scmp.eq.s32.totalorder %s17, 0
      %p80 = por %p78, %p79
      %p81 = scmp.ne.s32.totalorder %s69, %s70
      %p82 = scmp.eq.s32.totalorder %s18, 1
      %p83 = por %p81, %p82
      %p85 = scmp.ne.s32.totalorder %s70, %s84
      %p86 = scmp.eq.s32.totalorder %s18, 0
      %p87 = por %p85, %p86
      %s88 = ssub.s32 %s12, %s19
      %p89 = scmp.eq.s32.totalorder %s88, 0
      %s91 = sadd.s32 %s90, 1
      %s92 = scalar_select %p89, %s90, %s91
      %p95 = pneg %p89
      %p96 = scmp.eq.s32.totalorder %s12, 1
      %p97 = por %p95, %p96
      %p98 = scmp.ne.s32.totalorder %s90, %s93
      %p99 = scmp.eq.s32.totalorder %s12, 0
      %p100 = por %p98, %p99
      %p101 = scmp.ne.s32.totalorder %s90, %s93
      %p102 = scmp.eq.s32.totalorder %s17, 1
      %p103 = por %p101, %p102
      %p104 = scmp.ne.s32.totalorder %s93, %s94
      %p105 = scmp.eq.s32.totalorder %s17, 0
      %p106 = por %p104, %p105
      %p107 = scmp.ne.s32.totalorder %s93, %s94
      %p108 = scmp.eq.s32.totalorder %s18, 1
      %p109 = por %p107, %p108
      %p111 = scmp.ne.s32.totalorder %s94, %s110
      %p112 = scmp.eq.s32.totalorder %s18, 0
      %p113 = por %p111, %p112
      %p114 = scmp.le.s32.totalorder 1, %s12
      %p115 = scmp.lt.s32.totalorder %s12, 3
      %p116 = pnand %p114, %p115
      %p117 = pneg %p116
      // Predicated region
      $region9: #{tpu_custom_call.1} parent=5 // pred_check
        _
      $region10: #{tpu_custom_call.1} parent=5 // pred_check_branch
        %119 = sbr.rel (%p116) target = $region12
      $region11: #{tpu_custom_call.1} parent=5 // pred_region
        %s120 = ssub.s32 %s12, 1
        // Predicated region
        $region13: #{tpu_custom_call.1} parent=11 // pred_check
          %p121 = pneg %p59
        $region14: #{tpu_custom_call.1} parent=11 // pred_check_branch
          %123 = sbr.rel (%p121) target = $region16
        $region15: #{tpu_custom_call.1} parent=11 // pred_region
          _
        $region16: #{tpu_custom_call.1} parent=11 // pred_fallthru
          _
        // Predicated region
        $region17: #{tpu_custom_call.1} parent=11 // pred_check
          %p124 = pneg %p80
        $region18: #{tpu_custom_call.1} parent=11 // pred_check_branch
          %126 = sbr.rel (%p124) target = $region20
        $region19: #{tpu_custom_call.1} parent=11 // pred_region
          _
        $region20: #{tpu_custom_call.1} parent=11 // pred_fallthru
          _
      $region12: #{tpu_custom_call.1} parent=5 // pred_fallthru
        _
      %p127 = scmp.lt.s32.totalorder %s12, 2
      // Predicated region
      $region21: #{tpu_custom_call.1} parent=5 // pred_check
        %p128 = pneg %p127
      $region22: #{tpu_custom_call.1} parent=5 // pred_check_branch
        %130 = sbr.rel (%p128) target = $region24
      $region23: #{tpu_custom_call.1} parent=5 // pred_region
        // Predicated region
        $region25: #{tpu_custom_call.1} parent=23 // pred_check
          %p131 = pneg %p32
        $region26: #{tpu_custom_call.1} parent=23 // pred_check_branch
          %133 = sbr.rel (%p131) target = $region28
        $region27: #{tpu_custom_call.1} parent=23 // pred_region
          %p134 = scmp.lt.s32.totalorder %s12, 1
          %s135 = scalar_select %p134, %s12, 1
          %s136 = smul.addr %s135, 32
          %s137 = smul.addr %s136, 4
          %s138 = scalar_lea.vmem %s0, %s137
        $region28: #{tpu_custom_call.1} parent=23 // pred_fallthru
          _
      $region24: #{tpu_custom_call.1} parent=5 // pred_fallthru
        _
      %p139 = scmp.le.s32.totalorder 1, %s12
      %p140 = scmp.lt.s32.totalorder %s12, 3
      %p141 = pnand %p139, %p140
      %p142 = pneg %p141
      // Predicated region
      $region29: #{tpu_custom_call.1} parent=5 // pred_check
        _
      $region30: #{tpu_custom_call.1} parent=5 // pred_check_branch
        %144 = sbr.rel (%p141) target = $region32
      $region31: #{tpu_custom_call.1} parent=5 // pred_region
        %s145 = ssub.s32 %s12, 1
        %p146 = scmp.lt.s32.totalorder %s17, 1
        %s147 = scalar_select %p146, %s17, 1
        %s148 = smul.addr %s147, 32
        %s149 = smul.addr %s148, 4
        %s150 = scalar_lea.vmem %s0, %s149
        %p151 = pneg %p38
        %p152 = pneg %p35
        %p153 = pneg %p59
        %p154 = pneg %p56
        %p155 = pneg %p80
        %p156 = pneg %p77
        %p157 = pneg %p106
        %p158 = pneg %p103
        %s159 = sand.u32 %s93, 1
        %s160 = scalar_lea.sflag [#allocation3], %s159
        %s161 = sand.u32 %s93, 1
        %s162 = scalar_lea.vmem [#allocation2], %s161
        %p163 = scmp.lt.s32.totalorder %s17, 1
        %s164 = scalar_select %p163, %s17, 1
        %s165 = smul.addr %s164, 32
        %s166 = smul.addr %s165, 4
        %s167 = scalar_lea.vmem %s0, %s166
        %v168 = vld [vmem:[%s167] sm:$0xf]
        %v169 = vld [vmem:[%s167 + $0x4] sm:$0xf]
        %v170 = vld [vmem:[%s167 + $0x8] sm:$0xf]
        %v171 = vld [vmem:[%s167 + $0xc] sm:$0xf]
        %v172 = vld [vmem:[%s167 + $0x10] sm:$0xf]
        %v173 = vld [vmem:[%s167 + $0x14] sm:$0xf]
        %v174 = vld [vmem:[%s167 + $0x18] sm:$0xf]
        %v175 = vld [vmem:[%s167 + $0x1c] sm:$0xf]
        %v176 = vld [vmem:[%s167 + $0x20] sm:$0xf]
        %v177 = vld [vmem:[%s167 + $0x24] sm:$0xf]
        %v178 = vld [vmem:[%s167 + $0x28] sm:$0xf]
        %v179 = vld [vmem:[%s167 + $0x2c] sm:$0xf]
        %v180 = vld [vmem:[%s167 + $0x30] sm:$0xf]
        %v181 = vld [vmem:[%s167 + $0x34] sm:$0xf]
        %v182 = vld [vmem:[%s167 + $0x38] sm:$0xf]
        %v183 = vld [vmem:[%s167 + $0x3c] sm:$0xf]
        %v184 = vld [vmem:[%s167 + $0x40] sm:$0xf]
        %v185 = vld [vmem:[%s167 + $0x44] sm:$0xf]
        %v186 = vld [vmem:[%s167 + $0x48] sm:$0xf]
        %v187 = vld [vmem:[%s167 + $0x4c] sm:$0xf]
        %v188 = vld [vmem:[%s167 + $0x50] sm:$0xf]
        %v189 = vld [vmem:[%s167 + $0x54] sm:$0xf]
        %v190 = vld [vmem:[%s167 + $0x58] sm:$0xf]
        %v191 = vld [vmem:[%s167 + $0x5c] sm:$0xf]
        %v192 = vld [vmem:[%s167 + $0x60] sm:$0xf]
        %v193 = vld [vmem:[%s167 + $0x64] sm:$0xf]
        %v194 = vld [vmem:[%s167 + $0x68] sm:$0xf]
        %v195 = vld [vmem:[%s167 + $0x6c] sm:$0xf]
        %v196 = vld [vmem:[%s167 + $0x70] sm:$0xf]
        %v197 = vld [vmem:[%s167 + $0x74] sm:$0xf]
        %v198 = vld [vmem:[%s167 + $0x78] sm:$0xf]
        %v199 = vld [vmem:[%s167 + $0x7c] sm:$0xf]
        %v200 = vunpack.c.l.bf16 %v168
        %v201 = vunpack.c.l.bf16 %v169
        %v202 = vunpack.c.l.bf16 %v170
        %v203 = vunpack.c.l.bf16 %v171
        %v204 = vunpack.c.l.bf16 %v172
        %v205 = vunpack.c.l.bf16 %v173
        %v206 = vunpack.c.l.bf16 %v174
        %v207 = vunpack.c.l.bf16 %v175
        %v208 = vunpack.c.l.bf16 %v176
        %v209 = vunpack.c.l.bf16 %v177
        %v210 = vunpack.c.l.bf16 %v178
        %v211 = vunpack.c.l.bf16 %v179
        %v212 = vunpack.c.l.bf16 %v180
        %v213 = vunpack.c.l.bf16 %v181
        %v214 = vunpack.c.l.bf16 %v182
        %v215 = vunpack.c.l.bf16 %v183
        %v216 = vunpack.c.l.bf16 %v184
        %v217 = vunpack.c.l.bf16 %v185
        %v218 = vunpack.c.l.bf16 %v186
        %v219 = vunpack.c.l.bf16 %v187
        %v220 = vunpack.c.l.bf16 %v188
        %v221 = vunpack.c.l.bf16 %v189
        %v222 = vunpack.c.l.bf16 %v190
        %v223 = vunpack.c.l.bf16 %v191
        %v224 = vunpack.c.l.bf16 %v192
        %v225 = vunpack.c.l.bf16 %v193
        %v226 = vunpack.c.l.bf16 %v194
        %v227 = vunpack.c.l.bf16 %v195
        %v228 = vunpack.c.l.bf16 %v196
        %v229 = vunpack.c.l.bf16 %v197
        %v230 = vunpack.c.l.bf16 %v198
        %v231 = vunpack.c.l.bf16 %v199
        %vm232 = vcmask 64512
        %v233 = vsel %vm232, %v200, 0.0
        %v234 = vsel %vm232, %v201, 0.0
        %v235 = vadd.f32 %v233, %v234
        %v236 = vsel %vm232, %v202, 0.0
        %v237 = vadd.f32 %v235, %v236
        %v238 = vsel %vm232, %v203, 0.0
        %v239 = vadd.f32 %v237, %v238
        %v240 = vsel %vm232, %v204, 0.0
        %v241 = vadd.f32 %v239, %v240
        %v242 = vsel %vm232, %v205, 0.0
        %v243 = vadd.f32 %v241, %v242
        %v244 = vsel %vm232, %v206, 0.0
        %v245 = vadd.f32 %v243, %v244
        %v246 = vsel %vm232, %v207, 0.0
        %v247 = vadd.f32 %v245, %v246
        %v248 = vsel %vm232, %v208, 0.0
        %v249 = vadd.f32 %v247, %v248
        %v250 = vsel %vm232, %v209, 0.0
        %v251 = vadd.f32 %v249, %v250
        %v252 = vsel %vm232, %v210, 0.0
        %v253 = vadd.f32 %v251, %v252
        %v254 = vsel %vm232, %v211, 0.0
        %v255 = vadd.f32 %v253, %v254
        %v256 = vsel %vm232, %v212, 0.0
        %v257 = vadd.f32 %v255, %v256
        %v258 = vsel %vm232, %v213, 0.0
        %v259 = vadd.f32 %v257, %v258
        %v260 = vsel %vm232, %v214, 0.0
        %v261 = vadd.f32 %v259, %v260
        %v262 = vsel %vm232, %v215, 0.0
        %v263 = vadd.f32 %v261, %v262
        %v264 = vsel %vm232, %v216, 0.0
        %v265 = vadd.f32 %v263, %v264
        %v266 = vsel %vm232, %v217, 0.0
        %v267 = vadd.f32 %v265, %v266
        %v268 = vsel %vm232, %v218, 0.0
        %v269 = vadd.f32 %v267, %v268
        %v270 = vsel %vm232, %v219, 0.0
        %v271 = vadd.f32 %v269, %v270
        %v272 = vsel %vm232, %v220, 0.0
        %v273 = vadd.f32 %v271, %v272
        %v274 = vsel %vm232, %v221, 0.0
        %v275 = vadd.f32 %v273, %v274
        %v276 = vsel %vm232, %v222, 0.0
        %v277 = vadd.f32 %v275, %v276
        %v278 = vsel %vm232, %v223, 0.0
        %v279 = vadd.f32 %v277, %v278
        %v280 = vsel %vm232, %v224, 0.0
        %v281 = vadd.f32 %v279, %v280
        %v282 = vsel %vm232, %v225, 0.0
        %v283 = vadd.f32 %v281, %v282
        %v284 = vsel %vm232, %v226, 0.0
        %v285 = vadd.f32 %v283, %v284
        %v286 = vsel %vm232, %v227, 0.0
        %v287 = vadd.f32 %v285, %v286
        %v288 = vsel %vm232, %v228, 0.0
        %v289 = vadd.f32 %v287, %v288
        %v290 = vsel %vm232, %v229, 0.0
        %v291 = vadd.f32 %v289, %v290
        %v292 = vsel %vm232, %v230, 0.0
        %v293 = vadd.f32 %v291, %v292
        %v294 = vsel %vm232, %v231, 0.0
        %v295 = vadd.f32 %v293, %v294
        %v296 = vrot.slane %v295, 4
        %v297 = vadd.f32 %v295, %v296
        %v298 = vrot.slane %v297, 2
        %v299 = vadd.f32 %v297, %v298
        %v300 = vrot.slane %v299, 1
        %v301 = vadd.f32 %v299, %v300
        %v302 = vmul.f32 %v301, 0.00390625
        %v303 = vld [vmem:[%s1] sm:$0xff]
        %v305 = vsel %vm232, %v302, 0
        %307 = vmatpush.msra.mxu0 0.0
        %308 = vmatpush.msra.mxu0 0.0
        %309 = vmatpush.msra.mxu0 0.0
        %310 = vmatpush.msra.mxu0 0.0
        %311 = vmatpush.msra.mxu0 0.0
        %312 = vmatpush.msra.mxu0 0.0
        %313 = vmatpush.msra.mxu0 0.0
        %314 = vmatpush.msra.mxu0 0.0
        %315 = vmatpush.msra.mxu0 0.0
        %316 = vmatpush.msra.mxu0 0.0
        %317 = vmatpush.msra.mxu0 0.0
        %318 = vmatpush.msra.mxu0 0.0
        %319 = vmatpush.msra.mxu0 0.0
        %320 = vmatpush.msra.mxu0 0.0
        %321 = vmatpush.msra.mxu0 0.0
        %322 = vmatpush.msra.mxu0 %v303
        %323 = vmatmul.f32.gmra.mxu0 %v305
        %v324 = vpop.f32.mrf.mxu0
        %v325 = vadd.f32 0.0, %v324
        %326 = vdwg.mxu0
        %v327 = vld [vmem:[%s2] sm:$0x1]
        %v328 = vmul.f32 %v325, %v327
        %v329 = vld [vmem:[%s2 + $0x1] sm:$0x1]
        %v330 = vadd.f32 %v328, %v329
        %v331 = vmax.f32 %v330, 0.0
        %vm332 = vcmask 253952
        %333 = vst.msk [vmem:[%s162] sm:$0x1] %vm332, %v331
        %s334 = sand.u32 %s93, 1
        %s335 = scalar_lea.sflag [#allocation3], %s334
        %s336 = sand.u32 %s93, 1
        %s337 = scalar_lea.vmem [#allocation2], %s336
        // Predicated region
        $region33: #{tpu_custom_call.1} parent=31 // pred_check
          %p338 = pneg %p103
        $region34: #{tpu_custom_call.1} parent=31 // pred_check_branch
          %340 = sbr.rel (%p338) target = $region36
        $region35: #{tpu_custom_call.1} parent=31 // pred_region
          %342 = vsyncadd %s335, 0
          %s343 = scalar_lea.hbm %s3, %s17
          %s345 = sshll.u32 %s337, 4
          %s346 = int_to_ptr.vmem [resolvable:$true] %s345
          %s347 = sshll.u32 %s343, 4
          %s348 = int_to_ptr.hbm [resolvable:$true] %s347
          %350 = dma.vmem_to_hbm [thread:$0]  %s346, 16, %s348, %s335
        $region36: #{tpu_custom_call.1} parent=31 // pred_fallthru
          _
      $region32: #{tpu_custom_call.1} parent=5 // pred_fallthru
        _
      %p351 = scmp.le.s32.totalorder 2, %s12
      // Predicated region
      $region37: #{tpu_custom_call.1} parent=5 // pred_check
        %p352 = pneg %p351
      $region38: #{tpu_custom_call.1} parent=5 // pred_check_branch
        %354 = sbr.rel (%p352) target = $region40
      $region39: #{tpu_custom_call.1} parent=5 // pred_region
        %s355 = ssub.s32 %s12, 2
        // Predicated region
        $region41: #{tpu_custom_call.1} parent=39 // pred_check
          %p356 = pneg %p109
        $region42: #{tpu_custom_call.1} parent=39 // pred_check_branch
          %358 = sbr.rel (%p356) target = $region44
        $region43: #{tpu_custom_call.1} parent=39 // pred_region
          %s359 = sand.u32 %s94, 1
          %s360 = scalar_lea.sflag [#allocation3], %s359
          %s361 = sand.u32 %s94, 1
          %s362 = scalar_lea.vmem [#allocation2], %s361
          %364 = dma.done %s360, 16
        $region44: #{tpu_custom_call.1} parent=39 // pred_fallthru
          _
      $region40: #{tpu_custom_call.1} parent=5 // pred_fallthru
        _
    $region6: #{tpu_custom_call.1} parent=1 // loop_footer
      %s16 = sadd.s32 1, %s12
    $region7: #{tpu_custom_call.1} parent=1 // loop_footer_branch
      %11 = sbr.rel target = $region3
    $region8: #{tpu_custom_call.1} parent=1 // loop_exit
      _
    %365 = vsyncpa [#allocation3], 1
    %s366 = scalar_lea.sflag [#allocation3], 1
    %367 = vsyncpa %s366, 1

</llo_original>
